<compile_context>
chip_gen: v6e
topology: v6e:2x2x1
jax: 0.10.0
libtpu: 0.0.40
codegen_flags: <defaults>
</compile_context>

<pallas_src>
import functools

import jax
import jax.numpy as jnp
from jax.experimental import pallas as pl
from jax.experimental.pallas import tpu as pltpu


def _round_up(x, m):
    return (x + m - 1) // m * m


# ----------------------------------------------------------------------------
# Pallas kernel: fused linear + log-softmax (single lane-dense output)
# ----------------------------------------------------------------------------
def _categorical_kernel(x_ref, w_ref, b_ref, logp_ref):
    # x_ref: (TB, K) bf16   w_ref: (K, N_pad) bf16   b_ref: (1, N_pad) f32
    # Linear on the MXU with f32 accumulation.  Padded action columns have a
    # -1e30 bias baked in at init, so they never perturb the softmax and no
    # per-tile masking (iota/compare/select) is needed.
    logits = jnp.dot(x_ref[...], w_ref[...],
                     preferred_element_type=jnp.float32) + b_ref[...]

    # torch.distributions.Categorical(logits=...) normalization:
    #   logp = logits - logsumexp(logits, -1, keepdims=True)
    m = jnp.max(logits, axis=-1, keepdims=True)
    e = jnp.exp(logits - m)
    s = jnp.sum(e, axis=-1, keepdims=True)
    logp_ref[...] = logits - (m + jnp.log(s))


def categorical_forward(x, wp, bp, num_outputs):
    """Normalized log-probs of Categorical(logits = x @ W^T + b).

    `wp` is the cached pre-transposed, zero-padded (K, N_pad) bf16 weight and
    `bp` the cached (1, N_pad) f32 bias with -1e30 in the padded columns
    (built once in Categorical.__init__, not per call).
    """
    B, K = x.shape
    Kw, N_pad = wp.shape
    assert K == Kw, (K, Kw)

    # Batch tiling: at least two grid steps whenever possible (so the v7x
    # second TensorCore is used); tiles capped at 256 rows for large batches.
    B8 = _round_up(B, 8)
    if B8 <= 8:
        TB, B_pad = B8, B8
    elif B8 <= 512:
        TB = _round_up(pl.cdiv(B8, 2), 8)
        B_pad = _round_up(B8, TB)          # exactly 2 grid steps
    else:
        TB = 256
        B_pad = _round_up(B8, TB)
    grid = (B_pad // TB,)

    xc = x.astype(wp.dtype)
    xp = xc if B_pad == B else jnp.zeros((B_pad, K), wp.dtype).at[:B].set(xc)

    # Explicit VMEM budget: double-buffered x / out tiles, single-buffered
    # resident weight and bias, plus headroom for compiler scratch.
    # TODO(synk): heads whose (K, N_pad) weight alone exceeds the v7x VMEM
    # budget would need an extra K grid axis with an f32 accumulator.
    vmem_bytes = (2 * TB * K * xp.dtype.itemsize
                  + K * N_pad * wp.dtype.itemsize
                  + N_pad * bp.dtype.itemsize
                  + 2 * TB * N_pad * 4)
    vmem_limit = min(max(int(vmem_bytes * 1.25) + (2 << 20), 16 << 20), 96 << 20)

    logp_pad = pl.pallas_call(
        _categorical_kernel,
        out_shape=jax.ShapeDtypeStruct((B_pad, N_pad), jnp.float32),
        grid_spec=pltpu.PrefetchScalarGridSpec(
            num_scalar_prefetch=0,
            grid=grid,
            in_specs=[
                pl.BlockSpec((TB, K), lambda i: (i, 0)),          # x tile
                pl.BlockSpec((K, N_pad), lambda i: (0, 0),        # weight (resident)
                             pipeline_mode=pl.Buffered(1)),
                pl.BlockSpec((1, N_pad), lambda i: (0, 0),        # bias (resident)
                             pipeline_mode=pl.Buffered(1)),
            ],
            out_specs=pl.BlockSpec((TB, N_pad), lambda i: (i, 0)),
        ),
        compiler_params=pltpu.CompilerParams(
            dimension_semantics=("parallel",),   # batch tiles -> both TCs on v7x
            vmem_limit_bytes=vmem_limit),
    )(xp, wp, bp)

    return logp_pad[:B, :num_outputs]


# ----------------------------------------------------------------------------
# Lightweight JAX analogue of FixedCategorical (glue on top of kernel output)
# ----------------------------------------------------------------------------
class FixedCategorical:
    """`.logits` holds the NORMALIZED log-probabilities, matching
    torch.distributions.Categorical(logits=...).logits semantics."""

    def __init__(self, logits):
        self.logits = logits           # normalized log-probs (logsumexp == 0)

    @property
    def probs(self):
        return jnp.exp(self.logits)    # reconstructed outside the kernel

    def mode(self):
        return jnp.argmax(self.logits, axis=-1, keepdims=True)

    def log_probs(self, actions):
        # matches: log_prob(actions.squeeze(-1)).view(B, -1).sum(-1).unsqueeze(-1)
        a = jnp.squeeze(actions, axis=-1)
        lp = jnp.take_along_axis(self.logits, a[..., None], axis=-1)[..., 0]
        return lp.reshape(actions.shape[0], -1).sum(-1)[..., None]

    def sample(self, key):
        # TODO(synk): sampling uses host-level jax.random (not a Pallas kernel).
        return jax.random.categorical(key, self.logits, axis=-1)[..., None]


class Categorical:
    """JAX/Pallas port of the PyTorch Categorical head (nn.Linear -> FixedCategorical)."""

    def __init__(self, num_inputs, num_outputs, key, compute_dtype=jnp.bfloat16):
        kw, kb = jax.random.split(key)
        bound = 1.0 / float(num_inputs) ** 0.5
        # Trainable parameters kept unpadded / f32 (PyTorch Linear layout).
        self.weight = jax.random.uniform(
            kw, (num_outputs, num_inputs), jnp.float32, -bound, bound)
        self.bias = jax.random.uniform(
            kb, (num_outputs,), jnp.float32, -bound, bound)
        self.num_outputs = num_outputs

        # Kernel-side constants, built ONCE (not per forward call):
        #   * weight transposed to (K, N_pad), cast to bf16 (MXU-native),
        #   * bias padded with -1e30 so padded action columns never win
        #     the softmax (replaces the in-kernel iota/where mask).
        N_pad = _round_up(num_outputs, 128)
        self._wp = (jnp.zeros((num_inputs, N_pad), compute_dtype)
                    .at[:, :num_outputs].set(self.weight.T.astype(compute_dtype)))
        self._bp = (jnp.full((1, N_pad), -1e30, jnp.float32)
                    .at[0, :num_outputs].set(self.bias))

    def __call__(self, x):
        logp = categorical_forward(x, self._wp, self._bp, self.num_outputs)
        return FixedCategorical(logp)


# ----------------------------------------------------------------------------
if __name__ == "__main__":
    key = jax.random.PRNGKey(0)
    k_mod, k_x, k_x2 = jax.random.split(key, 3)

    B, NUM_INPUTS, NUM_OUTPUTS = 8, 32, 16
    x = jax.random.normal(k_x, (B, NUM_INPUTS), jnp.float32)

    head = Categorical(NUM_INPUTS, NUM_OUTPUTS, k_mod)
    dist = head(x)
    jax.block_until_ready(dist.logits)

    # Reference in plain JAX (same math as PyTorch's Linear + Categorical),
    # with bf16-cast matmul inputs / f32 accumulation to mirror the MXU path.
    def ref_logp(xv):
        xb = xv.astype(jnp.bfloat16).astype(jnp.float32)
        wb = head.weight.astype(jnp.bfloat16).astype(jnp.float32)
        logits = xb @ wb.T + head.bias
        lse = jax.scipy.special.logsumexp(logits, axis=-1, keepdims=True)
        return logits - lse

    ref = ref_logp(x)
    assert jnp.allclose(dist.logits, ref, atol=1e-4, rtol=1e-4)
    assert jnp.allclose(dist.probs, jnp.exp(ref), atol=1e-4, rtol=1e-4)
    assert jnp.array_equal(dist.mode(), jnp.argmax(ref, -1, keepdims=True))

    # Exercise log_probs path (argmax actions) against reference.
    actions = dist.mode()
    lp = dist.log_probs(actions)
    ref_lp = jnp.take_along_axis(ref, actions, axis=-1)
    assert jnp.allclose(lp, ref_lp, atol=1e-4, rtol=1e-4)

    # Larger, ragged batch: exercises batch padding and the 2-step grid.
    B2 = 100
    x2 = jax.random.normal(k_x2, (B2, NUM_INPUTS), jnp.float32)
    dist2 = head(x2)
    ref2 = ref_logp(x2)
    assert dist2.logits.shape == (B2, NUM_OUTPUTS)
    assert jnp.allclose(dist2.logits, ref2, atol=1e-4, rtol=1e-4)

    jax.block_until_ready(dist2.logits)
    print("KERNEL_OK")
</pallas_src>

<mosaic_0001>
module attributes {stable_mosaic.version = 11 : i64} {
  func.func @_categorical_kernel(%arg0: i32, %arg1: memref<8x32xbf16, #tpu.memory_space<vmem>>, %arg2: memref<32x128xbf16, #tpu.memory_space<vmem>>, %arg3: memref<1x128xf32, #tpu.memory_space<vmem>>, %arg4: memref<8x128xf32, #tpu.memory_space<vmem>>) attributes {dimension_semantics = [#tpu.dimension_semantics<parallel>], iteration_bounds = array<i64: 1>, scalar_prefetch = 0 : i64, scratch_operands = 0 : i64, tpu.core_type = #tpu.core_type<tc>, window_params = [{transform_indices = @transform_0, window_bounds = array<i64: 8, 32>}, {pipeline_mode = #tpu.pipeline_mode<synchronous>, transform_indices = @transform_1, window_bounds = array<i64: 32, 128>}, {pipeline_mode = #tpu.pipeline_mode<synchronous>, transform_indices = @transform_2, window_bounds = array<i64: 1, 128>}, {transform_indices = @transform_3, window_bounds = array<i64: 8, 128>}]} {
    %c0 = arith.constant 0 : index
    %c0_0 = arith.constant 0 : index
    %0 = vector.load %arg1[%c0, %c0_0] : memref<8x32xbf16, #tpu.memory_space<vmem>>, vector<8x32xbf16>
    %c0_1 = arith.constant 0 : index
    %c0_2 = arith.constant 0 : index
    %1 = vector.load %arg2[%c0_1, %c0_2] : memref<32x128xbf16, #tpu.memory_space<vmem>>, vector<32x128xbf16>
    %cst = arith.constant dense<0.000000e+00> : vector<8x128xf32>
    %2 = tpu.matmul %0, %1, %cst {dimension_numbers = #tpu.dot_dimension_numbers<[1], [0], [0], [1], [0, 0, 1, 1], [], []>} : vector<8x32xbf16>, vector<32x128xbf16>, vector<8x128xf32> -> vector<8x128xf32>
    %c0_3 = arith.constant 0 : index
    %c0_4 = arith.constant 0 : index
    %3 = vector.load %arg3[%c0_3, %c0_4] : memref<1x128xf32, #tpu.memory_space<vmem>>, vector<1x128xf32>
    %4 = vector.broadcast %3 : vector<1x128xf32> to vector<8x128xf32>
    %5 = arith.addf %2, %4 : vector<8x128xf32>
    %cst_5 = arith.constant dense<0xFF800000> : vector<8xf32>
    %6 = vector.multi_reduction <maximumf>, %5, %cst_5 [1] : vector<8x128xf32> to vector<8xf32>
    %7 = vector.shape_cast %6 : vector<8xf32> to vector<8x1xf32>
    %8 = vector.broadcast %7 : vector<8x1xf32> to vector<8x128xf32>
    %9 = arith.subf %5, %8 : vector<8x128xf32>
    %10 = math.exp %9 : vector<8x128xf32>
    %cst_6 = arith.constant dense<0.000000e+00> : vector<8xf32>
    %11 = vector.multi_reduction <add>, %10, %cst_6 [1] : vector<8x128xf32> to vector<8xf32>
    %12 = vector.shape_cast %11 : vector<8xf32> to vector<8x1xf32>
    %13 = math.log %12 : vector<8x1xf32>
    %14 = arith.addf %7, %13 : vector<8x1xf32>
    %15 = vector.broadcast %14 : vector<8x1xf32> to vector<8x128xf32>
    %16 = arith.subf %5, %15 : vector<8x128xf32>
    %c0_7 = arith.constant 0 : index
    %c0_8 = arith.constant 0 : index
    %17 = vector.load %arg4[%c0_7, %c0_8] : memref<8x128xf32, #tpu.memory_space<vmem>>, vector<8x128xf32>
    tpu.vector_store %arg4[%c0_7, %c0_8], %16 {strides = array<i32>} : memref<8x128xf32, #tpu.memory_space<vmem>>, vector<8x128xf32>,
    return
  }
  func.func @transform_0(%arg0: i32) -> (i32, i32) {
    %c0_i32 = arith.constant 0 : i32
    %c0_i32_0 = arith.constant 0 : i32
    return %arg0, %c0_i32 : i32, i32
  }
  func.func @transform_1(%arg0: i32) -> (i32, i32) {
    %c0_i32 = arith.constant 0 : i32
    %c0_i32_0 = arith.constant 0 : i32
    %c0_i32_1 = arith.constant 0 : i32
    return %c0_i32, %c0_i32_0 : i32, i32
  }
  func.func @transform_2(%arg0: i32) -> (i32, i32) {
    %c0_i32 = arith.constant 0 : i32
    %c0_i32_0 = arith.constant 0 : i32
    %c0_i32_1 = arith.constant 0 : i32
    return %c0_i32, %c0_i32_0 : i32, i32
  }
  func.func @transform_3(%arg0: i32) -> (i32, i32) {
    %c0_i32 = arith.constant 0 : i32
    %c0_i32_0 = arith.constant 0 : i32
    return %arg0, %c0_i32 : i32, i32
  }
}

</mosaic_0001>

<llo_original>
// kernel: tpu_custom_call.1
$region0: #{tpu_custom_call.1}
  #allocation0 [shape = 'u32[]', space=smem, size = 0x4, offset = 0x4, fixed_abs, tag = 'smem constant byte address 0x4 - core index']
  #allocation1 [shape = 'u32[144,128]{1,0:T(1,128)}', space=vmem, size = 0x12000, scoped, tag = 'internal scratch']
  %s0 = inlined_call_operand.hbm [shape: bf16[8,32], index: 0, kind: input, shape index: {}]
  %s1 = inlined_call_operand.hbm [shape: bf16[32,128], index: 1, kind: input, shape index: {}]
  %s2 = inlined_call_operand.vmem [shape: f32[1,128], index: 2, kind: input, shape index: {}]
  %s3 = inlined_call_operand.hbm [shape: f32[8,128], index: 3, kind: output, shape index: {}]
  %s4 = sld [smem:[#allocation0]]
  $region30: #{tpu_custom_call.1} parent=0
    _
  %s6 = ssub.s32 1, %s4
  %s7 = scalar_select 0, %s6, %s4
  $region1: #{tpu_custom_call.1} parent=0
    #allocation2 [shape = 'u8[2048]{0}', space=vmem, size = 0x800, scoped, tag = 'input window, operand 0, single buffered']
    #allocation3 [shape = 's32[1]{0}', space=sflag, size = 0x4, scoped, tag = 'scoped memory for tpu_custom_call.1']
    #allocation4 [shape = 's32[1]{0}', space=sflag, size = 0x4, scoped, tag = 'scoped memory for tpu_custom_call.1']
    #allocation5 [shape = 'u8[8192]{0}', space=vmem, size = 0x2000, scoped, tag = 'input window, operand 1, single buffered']
    #allocation6 [shape = 's32[1]{0}', space=sflag, size = 0x4, scoped, tag = 'scoped memory for tpu_custom_call.1']
    #allocation7 [shape = 'u8[4096]{0}', space=vmem, size = 0x1000, scoped, tag = 'output window, operand 0, single buffered']
    %8 = vsyncpa [#allocation3], 0
    %9 = vsyncpa [#allocation6], 0
    %10 = vsyncpa [#allocation4], 0
    // Predicated region
    $region2: #{tpu_custom_call.1} parent=1 // pred_check
      _
    $region3: #{tpu_custom_call.1} parent=1 // pred_check_branch
      %12 = sbr.rel (0) target = $region5
    $region4: #{tpu_custom_call.1} parent=1 // pred_region
      %s14 = ssub.s32 64, 64
      %15 = vsyncadd [#allocation3], %s14
      %s17 = sshll.u32 [#allocation2], 4
      %s18 = int_to_ptr.vmem [resolvable:$true] %s17
      %20 = dma.hbm_to_vmem [thread:$0]  %s0, 64, %s18, [#allocation3]
    $region5: #{tpu_custom_call.1} parent=1 // pred_fallthru
      _
    // Predicated region
    $region6: #{tpu_custom_call.1} parent=1 // pred_check
      _
    $region7: #{tpu_custom_call.1} parent=1 // pred_check_branch
      %22 = sbr.rel (0) target = $region9
    $region8: #{tpu_custom_call.1} parent=1 // pred_region
      %s24 = ssub.s32 256, 256
      %25 = vsyncadd [#allocation6], %s24
      %s26 = sshll.u32 [#allocation5], 4
      %s27 = int_to_ptr.vmem [resolvable:$true] %s26
      %32 = dma.hbm_to_vmem [thread:$0]  %s1, 256, %s27, [#allocation6], 64, 64, 4
    $region9: #{tpu_custom_call.1} parent=1 // pred_fallthru
      _
    // Predicated region
    $region10: #{tpu_custom_call.1} parent=1 // pred_check
      _
    $region11: #{tpu_custom_call.1} parent=1 // pred_check_branch
      %34 = sbr.rel (0) target = $region13
    $region12: #{tpu_custom_call.1} parent=1 // pred_region
      _
    $region13: #{tpu_custom_call.1} parent=1 // pred_fallthru
      _
    // Predicated region
    $region14: #{tpu_custom_call.1} parent=1 // pred_check
      _
    $region15: #{tpu_custom_call.1} parent=1 // pred_check_branch
      %36 = sbr.rel (0) target = $region17
    $region16: #{tpu_custom_call.1} parent=1 // pred_region
      %37 = dma.done [#allocation3], 64
    $region17: #{tpu_custom_call.1} parent=1 // pred_fallthru
      _
    // Predicated region
    $region18: #{tpu_custom_call.1} parent=1 // pred_check
      _
    $region19: #{tpu_custom_call.1} parent=1 // pred_check_branch
      %39 = sbr.rel (0) target = $region21
    $region20: #{tpu_custom_call.1} parent=1 // pred_region
      %40 = dma.done [#allocation6], 256
    $region21: #{tpu_custom_call.1} parent=1 // pred_fallthru
      _
    %v42 = vld [vmem:[#allocation2] sm:$0xf]
    %v43 = vld [vmem:[#allocation5] sm:$0xf]
    %v44 = vld [vmem:[#allocation5 + $0x4] sm:$0xf]
    %v45 = vld [vmem:[#allocation5 + $0x8] sm:$0xf]
    %v46 = vld [vmem:[#allocation5 + $0xc] sm:$0xf]
    %v47 = vld [vmem:[%s2] sm:$0x1]
    %v49 = vlaneseq
    %v50 = vshrl.u32 %v49, 7
    %v51 = vsub.s32 0, %v50
    %v52 = vrot.slane %v47, %v51
    %v58 = vunpack.c.l.b16 %v43
    %v59 = vunpack.c.l.b16 %v44
    %v60 = vunpack.c.l.b16 %v45
    %v61 = vunpack.c.l.b16 %v46
    %v62 = vpack.c.b16 %v59, %v58
    %v63 = vpack.c.b16 %v61, %v60
    %vm66 = vcmask 261120
    %v68 = vsel %vm66, %v42, 0
    %70 = vmatprep.subr.bf16.mxu0 0
    %71 = vmatpush1.bf16.msra.mxu0 0
    %72 = vmatprep.subr.bf16.mxu0 0
    %73 = vmatpush1.bf16.msra.mxu0 0
    %74 = vmatprep.subr.bf16.mxu0 0
    %75 = vmatpush1.bf16.msra.mxu0 0
    %76 = vmatprep.subr.bf16.mxu0 0
    %77 = vmatpush1.bf16.msra.mxu0 0
    %78 = vmatprep.subr.bf16.mxu0 0
    %79 = vmatpush1.bf16.msra.mxu0 0
    %80 = vmatprep.subr.bf16.mxu0 0
    %81 = vmatpush1.bf16.msra.mxu0 0
    %82 = vmatprep.subr.bf16.mxu0 0
    %83 = vmatpush1.bf16.msra.mxu0 %v63
    %84 = vmatprep.subr.bf16.mxu0 0
    %85 = vmatpush1.bf16.msra.mxu0 %v62
    %86 = vmatprep.subr.bf16.mxu0 0
    %87 = vmatpush2.bf16.msra.mxu0 0
    %88 = vmatprep.subr.bf16.mxu0 0
    %89 = vmatpush2.bf16.msra.mxu0 0
    %90 = vmatprep.subr.bf16.mxu0 0
    %91 = vmatpush2.bf16.msra.mxu0 0
    %92 = vmatprep.subr.bf16.mxu0 0
    %93 = vmatpush2.bf16.msra.mxu0 0
    %94 = vmatprep.subr.bf16.mxu0 0
    %95 = vmatpush2.bf16.msra.mxu0 0
    %96 = vmatprep.subr.bf16.mxu0 0
    %97 = vmatpush2.bf16.msra.mxu0 0
    %98 = vmatprep.subr.bf16.mxu0 0
    %99 = vmatpush2.bf16.msra.mxu0 0
    %100 = vmatprep.subr.bf16.mxu0 0
    %101 = vmatpush2.bf16.msra.mxu0 0
    %102 = vmatprep.mubr.bf16.mxu0 0
    %103 = vmatmul.mubr.bf16.gmra.mxu0 %v68
    %v104 = vpop.f32.mrf.mxu0
    %v105 = vadd.f32 %v52, %v104
    %v106 = vpop.f32.mrf.mxu0
    %v107 = vpop.f32.mrf.mxu0
    %v108 = vpop.f32.mrf.mxu0
    %109 = vdwg.mxu0
    %110 = vmax.xlane.f32.xlu0 %v105
    %v111 = vpop.xlane.xlu0 %110
    %v112 = vsub.f32 %v105, %v111
    %v113 = vmul.f32 %v112, 1.442695
    %v114 = vpow.pop %v113
    %115 = vadd.xlane.f32.xlu0 %v114
    %v116 = vpop.xlane.xlu0 %115
    %v117 = vlog2.pop %v116
    %v118 = vmul.f32 %v117, 0.6931472
    %v119 = vadd.f32 %v111, %v118
    %v120 = vsub.f32 %v105, %v119
    %121 = vst [vmem:[#allocation7] sm:$0xff] %v120
    // Predicated region
    $region22: #{tpu_custom_call.1} parent=1 // pred_check
      _
    $region23: #{tpu_custom_call.1} parent=1 // pred_check_branch
      %123 = sbr.rel (0) target = $region25
    $region24: #{tpu_custom_call.1} parent=1 // pred_region
      %s125 = ssub.s32 128, 128
      %126 = vsyncadd [#allocation4], %s125
      %s128 = sshll.u32 [#allocation7], 4
      %s129 = int_to_ptr.vmem [resolvable:$true] %s128
      %131 = dma.vmem_to_hbm [thread:$0]  %s129, 128, %s3, [#allocation4]
    $region25: #{tpu_custom_call.1} parent=1 // pred_fallthru
      _
    // Predicated region
    $region26: #{tpu_custom_call.1} parent=1 // pred_check
      _
    $region27: #{tpu_custom_call.1} parent=1 // pred_check_branch
      %133 = sbr.rel (0) target = $region29
    $region28: #{tpu_custom_call.1} parent=1 // pred_region
      %134 = dma.done [#allocation4], 128
    $region29: #{tpu_custom_call.1} parent=1 // pred_fallthru
      _
    %135 = vsyncpa [#allocation3], 1
    %136 = vsyncpa [#allocation6], 1
    %137 = vsyncpa [#allocation4], 1

</llo_original>
